<compile_context>
chip_gen: v7x
topology: tpu7x:2x2x1
jax: 0.10.0
libtpu: 0.0.40
codegen_flags: <defaults>
</compile_context>

<pallas_src>
import jax
import jax.numpy as jnp
from jax.experimental import pallas as pl
from jax.experimental.pallas import tpu as pltpu

LANE = 128      # lane width: feature dims padded to multiples of this -> dense stores
SUBLANE = 8     # sublane granularity: batch tile is a multiple of this


def _round_up(n, m):
    return (n + m - 1) // m * m


def simplenn_kernel(x_ref, w1_ref, b1_ref, w2_ref, b2_ref, o_ref):
    """One batch tile of sigmoid((x @ W1 + b1) @ W2 + b2).

    x_ref : (TB, in_dim)   bf16   streamed per grid step
    w1_ref: (in_dim, Hp)   bf16   resident (constant index_map)
    b1_ref: (1, Hp)        f32    resident
    w2_ref: (Hp, Op)       bf16   resident
    b2_ref: (1, Op)        f32    resident
    o_ref : (TB, Op)       out dtype, lane-dense (Op % 128 == 0)
    """
    # linear1 on the MXU with f32 accumulation
    h = jnp.dot(x_ref[...], w1_ref[...], preferred_element_type=jnp.float32)
    h = h + b1_ref[...]                      # (1, Hp) broadcasts over the tile rows
    # linear2: cast the hidden activations back to the matmul dtype for the 2nd MXU pass
    h = h.astype(w2_ref.dtype)
    y = jnp.dot(h, w2_ref[...], preferred_element_type=jnp.float32)
    y = y + b2_ref[...]
    # sigmoid epilogue: exp goes to the EUP slot; single dense store of the whole tile
    o_ref[...] = jax.nn.sigmoid(y).astype(o_ref.dtype)


def simplenn_forward(x, w1, b1, w2, b2, *, matmul_dtype=jnp.bfloat16,
                     max_batch_tile=512, vmem_budget_bytes=24 << 20):
    """x: [..., input_dim]; w1: [input_dim, hidden]; b1: [hidden];
       w2: [hidden, output_dim]; b2: [output_dim]  ->  out: [..., output_dim]"""
    lead_shape = x.shape[:-1]
    in_dim = x.shape[-1]
    x2d = x.reshape(-1, in_dim)              # PyTorch Linear flattens leading dims
    B = x2d.shape[0]
    hidden = w1.shape[1]
    out_dim = w2.shape[1]
    out_dtype = x.dtype

    # ---- pad feature dims to 128-lane multiples (dense MXU tiles, unmasked vst) ----
    hid_p = _round_up(hidden, LANE)
    out_p = _round_up(out_dim, LANE)

    w1_p = jnp.zeros((in_dim, hid_p), matmul_dtype).at[:, :hidden].set(w1.astype(matmul_dtype))
    w2_p = jnp.zeros((hid_p, out_p), matmul_dtype).at[:hidden, :out_dim].set(w2.astype(matmul_dtype))
    # Biases pre-shaped (1, padded_dim) in f32: hoisted once, resident in VMEM.
    b1_p = jnp.zeros((1, hid_p), jnp.float32).at[0, :hidden].set(b1.astype(jnp.float32))
    b2_p = jnp.zeros((1, out_p), jnp.float32).at[0, :out_dim].set(b2.astype(jnp.float32))

    # ---- choose the batch tile: multiple of 8, capped by a conservative VMEM budget
    # (double-buffered x/out tiles + resident weights must fit; budget sized for v7x). ----
    itemsize_mm = jnp.dtype(matmul_dtype).itemsize
    resident_bytes = (w1_p.size + w2_p.size) * itemsize_mm + (hid_p + out_p) * 4
    row_bytes = in_dim * itemsize_mm + out_p * jnp.dtype(out_dtype).itemsize
    tb = max_batch_tile
    while tb > SUBLANE and resident_bytes + 2 * tb * row_bytes > vmem_budget_bytes:
        tb //= 2
    tb = max(SUBLANE, min(tb, _round_up(B, SUBLANE)))

    # ---- pad batch so the grid tiles evenly; padded rows are sliced off below ----
    b_pad = _round_up(B, tb)
    x_p = jnp.zeros((b_pad, in_dim), matmul_dtype).at[:B].set(x2d.astype(matmul_dtype))

    out_padded = pl.pallas_call(
        simplenn_kernel,
        out_shape=jax.ShapeDtypeStruct((b_pad, out_p), out_dtype),
        grid_spec=pltpu.PrefetchScalarGridSpec(
            num_scalar_prefetch=0,
            grid=(b_pad // tb,),
            in_specs=[
                pl.BlockSpec((tb, in_dim), lambda i: (i, 0)),      # x: streamed over batch
                pl.BlockSpec((in_dim, hid_p), lambda i: (0, 0)),   # W1: resident
                pl.BlockSpec((1, hid_p), lambda i: (0, 0)),        # b1: resident
                pl.BlockSpec((hid_p, out_p), lambda i: (0, 0)),    # W2: resident
                pl.BlockSpec((1, out_p), lambda i: (0, 0)),        # b2: resident
            ],
            out_specs=pl.BlockSpec((tb, out_p), lambda i: (i, 0)),
        ),
        compiler_params=pltpu.CompilerParams(
            # batch grid axis is independent -> let 2-TC chips (v7x) split it
            dimension_semantics=("parallel",),
        ),
    )(x_p, w1_p, b1_p, w2_p, b2_p)

    # strip batch and lane padding, restore leading dims
    return out_padded[:B, :out_dim].reshape(*lead_shape, out_dim)


if __name__ == "__main__":
    # Small shapes consistent with the module: input_dim=16, hidden_dim=32, output_dim=8
    B, input_dim, hidden_dim, output_dim = 8, 16, 32, 8

    key = jax.random.PRNGKey(0)
    kx, kw1, kb1, kw2, kb2 = jax.random.split(key, 5)

    x = jax.random.normal(kx, (B, input_dim), dtype=jnp.float32)

    # Deterministic parameter init (PyTorch-style uniform bounds, stored transposed).
    bound1 = 1.0 / (input_dim ** 0.5)
    w1 = jax.random.uniform(kw1, (input_dim, hidden_dim), jnp.float32, -bound1, bound1)
    b1 = jax.random.uniform(kb1, (hidden_dim,), jnp.float32, -bound1, bound1)
    bound2 = 1.0 / (hidden_dim ** 0.5)
    w2 = jax.random.uniform(kw2, (hidden_dim, output_dim), jnp.float32, -bound2, bound2)
    b2 = jax.random.uniform(kb2, (output_dim,), jnp.float32, -bound2, bound2)

    out = simplenn_forward(x, w1, b1, w2, b2)
    out = jax.block_until_ready(out)
    assert out.shape == (B, output_dim)

    # Reference 1: same bf16-operand / f32-accumulate numerics as the kernel (tight tol).
    xb, w1b, w2b = (a.astype(jnp.bfloat16) for a in (x, w1, w2))
    h_ref = jnp.dot(xb, w1b, preferred_element_type=jnp.float32) + b1
    y_ref = jnp.dot(h_ref.astype(jnp.bfloat16), w2b, preferred_element_type=jnp.float32) + b2
    ref_bf16 = jax.nn.sigmoid(y_ref)
    assert jnp.allclose(out, ref_bf16, atol=1e-3, rtol=1e-3)

    # Reference 2: full-f32 math (loose tol, bf16 operand rounding only).
    ref_f32 = jax.nn.sigmoid((x @ w1 + b1) @ w2 + b2)
    assert jnp.allclose(out, ref_f32, atol=3e-2, rtol=3e-2)

    # NOTE: at these toy shapes the kernel is launch-overhead dominated; benchmark at
    # production batch sizes (>= 1024) against the HBM roofline for x + out bytes.
    print("KERNEL_OK")
</pallas_src>

<mosaic_0001>
module attributes {stable_mosaic.version = 11 : i64} {
  func.func @simplenn_kernel(%arg0: i32, %arg1: memref<8x16xbf16, #tpu.memory_space<vmem>>, %arg2: memref<16x128xbf16, #tpu.memory_space<vmem>>, %arg3: memref<1x128xf32, #tpu.memory_space<vmem>>, %arg4: memref<128x128xbf16, #tpu.memory_space<vmem>>, %arg5: memref<1x128xf32, #tpu.memory_space<vmem>>, %arg6: memref<8x128xf32, #tpu.memory_space<vmem>>) attributes {dimension_semantics = [#tpu.dimension_semantics<parallel>], iteration_bounds = array<i64: 1>, scalar_prefetch = 0 : i64, scratch_operands = 0 : i64, tpu.core_type = #tpu.core_type<tc>, window_params = [{transform_indices = @transform_0, window_bounds = array<i64: 8, 16>}, {pipeline_mode = #tpu.pipeline_mode<synchronous>, transform_indices = @transform_1, window_bounds = array<i64: 16, 128>}, {pipeline_mode = #tpu.pipeline_mode<synchronous>, transform_indices = @transform_2, window_bounds = array<i64: 1, 128>}, {pipeline_mode = #tpu.pipeline_mode<synchronous>, transform_indices = @transform_3, window_bounds = array<i64: 128, 128>}, {pipeline_mode = #tpu.pipeline_mode<synchronous>, transform_indices = @transform_4, window_bounds = array<i64: 1, 128>}, {transform_indices = @transform_5, window_bounds = array<i64: 8, 128>}]} {
    %c0 = arith.constant 0 : index
    %c0_0 = arith.constant 0 : index
    %0 = vector.load %arg1[%c0, %c0_0] : memref<8x16xbf16, #tpu.memory_space<vmem>>, vector<8x16xbf16>
    %c0_1 = arith.constant 0 : index
    %c0_2 = arith.constant 0 : index
    %1 = vector.load %arg2[%c0_1, %c0_2] : memref<16x128xbf16, #tpu.memory_space<vmem>>, vector<16x128xbf16>
    %cst = arith.constant dense<0.000000e+00> : vector<8x128xf32>
    %2 = tpu.matmul %0, %1, %cst {dimension_numbers = #tpu.dot_dimension_numbers<[1], [0], [0], [1], [0, 0, 1, 1], [], []>} : vector<8x16xbf16>, vector<16x128xbf16>, vector<8x128xf32> -> vector<8x128xf32>
    %c0_3 = arith.constant 0 : index
    %c0_4 = arith.constant 0 : index
    %3 = vector.load %arg3[%c0_3, %c0_4] : memref<1x128xf32, #tpu.memory_space<vmem>>, vector<1x128xf32>
    %4 = vector.broadcast %3 : vector<1x128xf32> to vector<8x128xf32>
    %5 = arith.addf %2, %4 : vector<8x128xf32>
    %6 = arith.truncf %5 : vector<8x128xf32> to vector<8x128xbf16>
    %c0_5 = arith.constant 0 : index
    %c0_6 = arith.constant 0 : index
    %7 = vector.load %arg4[%c0_5, %c0_6] : memref<128x128xbf16, #tpu.memory_space<vmem>>, vector<128x128xbf16>
    %cst_7 = arith.constant dense<0.000000e+00> : vector<8x128xf32>
    %8 = tpu.matmul %6, %7, %cst_7 {dimension_numbers = #tpu.dot_dimension_numbers<[1], [0], [0], [1], [0, 0, 1, 1], [], []>} : vector<8x128xbf16>, vector<128x128xbf16>, vector<8x128xf32> -> vector<8x128xf32>
    %c0_8 = arith.constant 0 : index
    %c0_9 = arith.constant 0 : index
    %9 = vector.load %arg5[%c0_8, %c0_9] : memref<1x128xf32, #tpu.memory_space<vmem>>, vector<1x128xf32>
    %10 = vector.broadcast %9 : vector<1x128xf32> to vector<8x128xf32>
    %11 = arith.addf %8, %10 : vector<8x128xf32>
    %12 = arith.negf %11 : vector<8x128xf32>
    %13 = math.exp %12 : vector<8x128xf32>
    %cst_10 = arith.constant 1.000000e+00 : f32
    %14 = vector.broadcast %cst_10 : f32 to vector<8x128xf32>
    %15 = arith.addf %14, %13 : vector<8x128xf32>
    %16 = arith.divf %14, %15 : vector<8x128xf32>
    %c0_11 = arith.constant 0 : index
    %c0_12 = arith.constant 0 : index
    %17 = vector.load %arg6[%c0_11, %c0_12] : memref<8x128xf32, #tpu.memory_space<vmem>>, vector<8x128xf32>
    tpu.vector_store %arg6[%c0_11, %c0_12], %16 {strides = array<i32>} : memref<8x128xf32, #tpu.memory_space<vmem>>, vector<8x128xf32>,
    return
  }
  func.func @transform_0(%arg0: i32) -> (i32, i32) {
    %c0_i32 = arith.constant 0 : i32
    %c0_i32_0 = arith.constant 0 : i32
    return %arg0, %c0_i32 : i32, i32
  }
  func.func @transform_1(%arg0: i32) -> (i32, i32) {
    %c0_i32 = arith.constant 0 : i32
    %c0_i32_0 = arith.constant 0 : i32
    %c0_i32_1 = arith.constant 0 : i32
    return %c0_i32, %c0_i32_0 : i32, i32
  }
  func.func @transform_2(%arg0: i32) -> (i32, i32) {
    %c0_i32 = arith.constant 0 : i32
    %c0_i32_0 = arith.constant 0 : i32
    %c0_i32_1 = arith.constant 0 : i32
    return %c0_i32, %c0_i32_0 : i32, i32
  }
  func.func @transform_3(%arg0: i32) -> (i32, i32) {
    %c0_i32 = arith.constant 0 : i32
    %c0_i32_0 = arith.constant 0 : i32
    %c0_i32_1 = arith.constant 0 : i32
    return %c0_i32, %c0_i32_0 : i32, i32
  }
  func.func @transform_4(%arg0: i32) -> (i32, i32) {
    %c0_i32 = arith.constant 0 : i32
    %c0_i32_0 = arith.constant 0 : i32
    %c0_i32_1 = arith.constant 0 : i32
    return %c0_i32, %c0_i32_0 : i32, i32
  }
  func.func @transform_5(%arg0: i32) -> (i32, i32) {
    %c0_i32 = arith.constant 0 : i32
    %c0_i32_0 = arith.constant 0 : i32
    return %arg0, %c0_i32 : i32, i32
  }
}

</mosaic_0001>

<llo_original>
// kernel: tpu_custom_call.1
$region0: #{tpu_custom_call.1}
  #allocation0 [shape = 'u32[]', space=smem, size = 0x4, offset = 0x4, fixed_abs, tag = 'smem constant byte address 0x4 - core index']
  #allocation1 [shape = 'u32[144,128]{1,0:T(1,128)}', space=vmem, size = 0x12000, scoped, tag = 'internal scratch']
  %s0 = inlined_call_operand.hbm [shape: bf16[8,16], index: 0, kind: input, shape index: {}]
  %s1 = inlined_call_operand.hbm [shape: bf16[16,128], index: 1, kind: input, shape index: {}]
  %s2 = inlined_call_operand.vmem [shape: f32[1,128], index: 2, kind: input, shape index: {}]
  %s3 = inlined_call_operand.hbm [shape: bf16[128,128], index: 3, kind: input, shape index: {}]
  %s4 = inlined_call_operand.vmem [shape: f32[1,128], index: 4, kind: input, shape index: {}]
  %s5 = inlined_call_operand.hbm [shape: f32[8,128], index: 5, kind: output, shape index: {}]
  %s6 = sld [smem:[#allocation0]]
  $region42: #{tpu_custom_call.1} parent=0
    _
  %s8 = ssub.s32 1, %s6
  %s9 = scalar_select 0, %s8, %s6
  $region1: #{tpu_custom_call.1} parent=0
    #allocation2 [shape = 'u8[2048]{0}', space=vmem, size = 0x800, scoped, tag = 'input window, operand 0, single buffered']
    #allocation3 [shape = 's32[1]{0}', space=sflag, size = 0x4, scoped, tag = 'scoped memory for tpu_custom_call.1']
    #allocation4 [shape = 's32[1]{0}', space=sflag, size = 0x4, scoped, tag = 'scoped memory for tpu_custom_call.1']
    #allocation5 [shape = 'u8[4096]{0}', space=vmem, size = 0x1000, scoped, tag = 'input window, operand 1, single buffered']
    #allocation6 [shape = 's32[1]{0}', space=sflag, size = 0x4, scoped, tag = 'scoped memory for tpu_custom_call.1']
    #allocation7 [shape = 'u8[32768]{0}', space=vmem, size = 0x8000, scoped, tag = 'input window, operand 3, single buffered']
    #allocation8 [shape = 'u8[4096]{0}', space=vmem, size = 0x1000, scoped, tag = 'output window, operand 0, single buffered']
    %10 = vsyncpa [#allocation3], 0
    %11 = vsyncpa [#allocation6], 0
    %12 = vsyncpa [#allocation4], 0
    // Predicated region
    $region2: #{tpu_custom_call.1} parent=1 // pred_check
      _
    $region3: #{tpu_custom_call.1} parent=1 // pred_check_branch
      %14 = sbr.rel (0) target = $region5
    $region4: #{tpu_custom_call.1} parent=1 // pred_region
      %s16 = ssub.s32 64, 64
      %17 = vsyncadd [#allocation3], %s16
      %s19 = sshll.u32 [#allocation2], 4
      %s20 = int_to_ptr.vmem [resolvable:$true] %s19
      %22 = dma.hbm_to_vmem [thread:$0]  %s0, 64, %s20, [#allocation3]
    $region5: #{tpu_custom_call.1} parent=1 // pred_fallthru
      _
    // Predicated region
    $region6: #{tpu_custom_call.1} parent=1 // pred_check
      _
    $region7: #{tpu_custom_call.1} parent=1 // pred_check_branch
      %24 = sbr.rel (0) target = $region9
    $region8: #{tpu_custom_call.1} parent=1 // pred_region
      %s26 = ssub.s32 128, 128
      %27 = vsyncadd [#allocation6], %s26
      %s28 = sshll.u32 [#allocation5], 4
      %s29 = int_to_ptr.vmem [resolvable:$true] %s28
      %34 = dma.hbm_to_vmem [thread:$0]  %s1, 128, %s29, [#allocation6], 64, 64, 4
    $region9: #{tpu_custom_call.1} parent=1 // pred_fallthru
      _
    // Predicated region
    $region10: #{tpu_custom_call.1} parent=1 // pred_check
      _
    $region11: #{tpu_custom_call.1} parent=1 // pred_check_branch
      %36 = sbr.rel (0) target = $region13
    $region12: #{tpu_custom_call.1} parent=1 // pred_region
      _
    $region13: #{tpu_custom_call.1} parent=1 // pred_fallthru
      _
    // Predicated region
    $region14: #{tpu_custom_call.1} parent=1 // pred_check
      _
    $region15: #{tpu_custom_call.1} parent=1 // pred_check_branch
      %38 = sbr.rel (0) target = $region17
    $region16: #{tpu_custom_call.1} parent=1 // pred_region
      %s40 = ssub.s32 1024, 1024
      %41 = vsyncadd [#allocation6], %s40
      %s42 = sshll.u32 [#allocation7], 4
      %s43 = int_to_ptr.vmem [resolvable:$true] %s42
      %48 = dma.hbm_to_vmem [thread:$0]  %s3, 1024, %s43, [#allocation6], 64, 64, 4
    $region17: #{tpu_custom_call.1} parent=1 // pred_fallthru
      _
    // Predicated region
    $region18: #{tpu_custom_call.1} parent=1 // pred_check
      _
    $region19: #{tpu_custom_call.1} parent=1 // pred_check_branch
      %50 = sbr.rel (0) target = $region21
    $region20: #{tpu_custom_call.1} parent=1 // pred_region
      _
    $region21: #{tpu_custom_call.1} parent=1 // pred_fallthru
      _
    // Predicated region
    $region22: #{tpu_custom_call.1} parent=1 // pred_check
      _
    $region23: #{tpu_custom_call.1} parent=1 // pred_check_branch
      %52 = sbr.rel (0) target = $region25
    $region24: #{tpu_custom_call.1} parent=1 // pred_region
      %53 = dma.done [#allocation3], 64
    $region25: #{tpu_custom_call.1} parent=1 // pred_fallthru
      _
    // Predicated region
    $region26: #{tpu_custom_call.1} parent=1 // pred_check
      _
    $region27: #{tpu_custom_call.1} parent=1 // pred_check_branch
      %55 = sbr.rel (0) target = $region29
    $region28: #{tpu_custom_call.1} parent=1 // pred_region
      %56 = dma.done [#allocation6], 128
    $region29: #{tpu_custom_call.1} parent=1 // pred_fallthru
      _
    // Predicated region
    $region30: #{tpu_custom_call.1} parent=1 // pred_check
      _
    $region31: #{tpu_custom_call.1} parent=1 // pred_check_branch
      %58 = sbr.rel (0) target = $region33
    $region32: #{tpu_custom_call.1} parent=1 // pred_region
      %59 = dma.done [#allocation6], 1024
    $region33: #{tpu_custom_call.1} parent=1 // pred_fallthru
      _
    %v61 = vld [vmem:[#allocation2] sm:$0xf]
    %v62 = vld [vmem:[#allocation5] sm:$0xf]
    %v63 = vld [vmem:[#allocation5 + $0x4] sm:$0xf]
    %v64 = vld [vmem:[%s2] sm:$0x1]
    %v66 = vlaneseq
    %v67 = vshrl.u32 %v66, 7
    %v68 = vsub.s32 0, %v67
    %v69 = vrot.slane %v64, %v68
    %v73 = vunpack.c.l.b16 %v62
    %v74 = vunpack.c.l.b16 %v63
    %v75 = vpack.c.b16 %v74, %v73
    %vm77 = vcmask 130048
    %v79 = vsel %vm77, %v61, 0
    %81 = vmatprep.subr.bf16.mxu0 0
    %82 = vmatpush1.bf16.msra.mxu0 %v75
    %83 = vmatprep.subr.bf16.mxu0 0
    %84 = vmatpush1.bf16.msra.mxu0 0
    %85 = vmatprep.subr.bf16.mxu0 0
    %86 = vmatpush1.bf16.msra.mxu0 0
    %87 = vmatprep.subr.bf16.mxu0 0
    %88 = vmatpush1.bf16.msra.mxu0 0
    %89 = vmatprep.subr.bf16.mxu0 0
    %90 = vmatpush1.bf16.msra.mxu0 0
    %91 = vmatprep.subr.bf16.mxu0 0
    %92 = vmatpush1.bf16.msra.mxu0 0
    %93 = vmatprep.subr.bf16.mxu0 0
    %94 = vmatpush1.bf16.msra.mxu0 0
    %95 = vmatprep.subr.bf16.mxu0 0
    %96 = vmatpush1.bf16.msra.mxu0 0
    %97 = vmatprep.subr.bf16.mxu0 0
    %98 = vmatpush1.bf16.msra.mxu0 0
    %99 = vmatprep.subr.bf16.mxu0 0
    %100 = vmatpush1.bf16.msra.mxu0 0
    %101 = vmatprep.subr.bf16.mxu0 0
    %102 = vmatpush1.bf16.msra.mxu0 0
    %103 = vmatprep.subr.bf16.mxu0 0
    %104 = vmatpush1.bf16.msra.mxu0 0
    %105 = vmatprep.subr.bf16.mxu0 0
    %106 = vmatpush1.bf16.msra.mxu0 0
    %107 = vmatprep.subr.bf16.mxu0 0
    %108 = vmatpush1.bf16.msra.mxu0 0
    %109 = vmatprep.subr.bf16.mxu0 0
    %110 = vmatpush1.bf16.msra.mxu0 0
    %111 = vmatprep.subr.bf16.mxu0 0
    %112 = vmatpush1.bf16.msra.mxu0 0
    %113 = vmatprep.mubr.bf16.mxu0 0
    %114 = vmatmul.mubr.bf16.gmra.mrb[0].mxu0 %v79
    %v115 = vpop.f32.mrb[0].mxu0
    %v116 = vadd.f32 %v69, %v115
    %v117 = vpop.f32.mrb[0].mxu0
    %v118 = vpop.f32.mrb[0].mxu0
    %v119 = vpop.f32.mrb[0].mxu0
    %120 = vdwg.mxu0
    %v121 = vpack.c.bf16 %v116, %v116
    %v122 = vld [vmem:[#allocation7] sm:$0xf]
    %v123 = vld [vmem:[#allocation7 + $0x4] sm:$0xf]
    %v124 = vld [vmem:[#allocation7 + $0x8] sm:$0xf]
    %v125 = vld [vmem:[#allocation7 + $0xc] sm:$0xf]
    %v126 = vld [vmem:[#allocation7 + $0x10] sm:$0xf]
    %v127 = vld [vmem:[#allocation7 + $0x14] sm:$0xf]
    %v128 = vld [vmem:[#allocation7 + $0x18] sm:$0xf]
    %v129 = vld [vmem:[#allocation7 + $0x1c] sm:$0xf]
    %v130 = vld [vmem:[#allocation7 + $0x20] sm:$0xf]
    %v131 = vld [vmem:[#allocation7 + $0x24] sm:$0xf]
    %v132 = vld [vmem:[#allocation7 + $0x28] sm:$0xf]
    %v133 = vld [vmem:[#allocation7 + $0x2c] sm:$0xf]
    %v134 = vld [vmem:[#allocation7 + $0x30] sm:$0xf]
    %v135 = vld [vmem:[#allocation7 + $0x34] sm:$0xf]
    %v136 = vld [vmem:[#allocation7 + $0x38] sm:$0xf]
    %v137 = vld [vmem:[#allocation7 + $0x3c] sm:$0xf]
    %v138 = vld [vmem:[%s4] sm:$0x1]
    %v140 = vlaneseq
    %v141 = vshrl.u32 %v140, 7
    %v142 = vsub.s32 0, %v141
    %v143 = vrot.slane %v138, %v142
    %v161 = vunpack.c.l.b16 %v122
    %v162 = vunpack.c.l.b16 %v123
    %v163 = vunpack.c.l.b16 %v124
    %v164 = vunpack.c.l.b16 %v125
    %v165 = vunpack.c.l.b16 %v126
    %v166 = vunpack.c.l.b16 %v127
    %v167 = vunpack.c.l.b16 %v128
    %v168 = vunpack.c.l.b16 %v129
    %v169 = vunpack.c.l.b16 %v130
    %v170 = vunpack.c.l.b16 %v131
    %v171 = vunpack.c.l.b16 %v132
    %v172 = vunpack.c.l.b16 %v133
    %v173 = vunpack.c.l.b16 %v134
    %v174 = vunpack.c.l.b16 %v135
    %v175 = vunpack.c.l.b16 %v136
    %v176 = vunpack.c.l.b16 %v137
    %v177 = vpack.c.b16 %v162, %v161
    %v178 = vpack.c.b16 %v164, %v163
    %v179 = vpack.c.b16 %v166, %v165
    %v180 = vpack.c.b16 %v168, %v167
    %v181 = vpack.c.b16 %v170, %v169
    %v182 = vpack.c.b16 %v172, %v171
    %v183 = vpack.c.b16 %v174, %v173
    %v184 = vpack.c.b16 %v176, %v175
    %193 = vmatprep.subr.bf16.mxu0 0
    %194 = vmatpush1.bf16.msra.mxu0 %v177
    %195 = vmatprep.subr.bf16.mxu0 0
    %196 = vmatpush1.bf16.msra.mxu0 %v178
    %197 = vmatprep.subr.bf16.mxu0 0
    %198 = vmatpush1.bf16.msra.mxu0 %v179
    %199 = vmatprep.subr.bf16.mxu0 0
    %200 = vmatpush1.bf16.msra.mxu0 %v180
    %201 = vmatprep.subr.bf16.mxu0 0
    %202 = vmatpush1.bf16.msra.mxu0 %v181
    %203 = vmatprep.subr.bf16.mxu0 0
    %204 = vmatpush1.bf16.msra.mxu0 %v182
    %205 = vmatprep.subr.bf16.mxu0 0
    %206 = vmatpush1.bf16.msra.mxu0 %v183
    %207 = vmatprep.subr.bf16.mxu0 0
    %208 = vmatpush1.bf16.msra.mxu0 %v184
    %209 = vmatprep.subr.bf16.mxu0 0
    %210 = vmatpush1.bf16.msra.mxu0 0
    %211 = vmatprep.subr.bf16.mxu0 0
    %212 = vmatpush1.bf16.msra.mxu0 0
    %213 = vmatprep.subr.bf16.mxu0 0
    %214 = vmatpush1.bf16.msra.mxu0 0
    %215 = vmatprep.subr.bf16.mxu0 0
    %216 = vmatpush1.bf16.msra.mxu0 0
    %217 = vmatprep.subr.bf16.mxu0 0
    %218 = vmatpush1.bf16.msra.mxu0 0
    %219 = vmatprep.subr.bf16.mxu0 0
    %220 = vmatpush1.bf16.msra.mxu0 0
    %221 = vmatprep.subr.bf16.mxu0 0
    %222 = vmatpush1.bf16.msra.mxu0 0
    %223 = vmatprep.subr.bf16.mxu0 0
    %224 = vmatpush1.bf16.msra.mxu0 0
    %225 = vmatprep.mubr.bf16.mxu0 0
    %226 = vmatmul.mubr.bf16.gmra.mrb[0].mxu0 %v121
    %v227 = vpop.f32.mrb[0].mxu0
    %v228 = vadd.f32 %v143, %v227
    %v229 = vpop.f32.mrb[0].mxu0
    %v230 = vpop.f32.mrb[0].mxu0
    %v231 = vpop.f32.mrb[0].mxu0
    %232 = vdwg.mxu0
    %v233 = vxor.u32 %v228, 2147483648
    %v234 = vmul.f32 %v233, 1.442695
    %v235 = vpow.pop %v234
    %v236 = vadd.f32 %v235, 1.0
    %v237 = vrcp.pop %v236
    %v238 = vmul.f32 1.0, %v237
    %239 = vst [vmem:[#allocation8] sm:$0xff] %v238
    // Predicated region
    $region34: #{tpu_custom_call.1} parent=1 // pred_check
      _
    $region35: #{tpu_custom_call.1} parent=1 // pred_check_branch
      %241 = sbr.rel (0) target = $region37
    $region36: #{tpu_custom_call.1} parent=1 // pred_region
      %s243 = ssub.s32 128, 128
      %244 = vsyncadd [#allocation4], %s243
      %s246 = sshll.u32 [#allocation8], 4
      %s247 = int_to_ptr.vmem [resolvable:$true] %s246
      %249 = dma.vmem_to_hbm [thread:$0]  %s247, 128, %s5, [#allocation4]
    $region37: #{tpu_custom_call.1} parent=1 // pred_fallthru
      _
    // Predicated region
    $region38: #{tpu_custom_call.1} parent=1 // pred_check
      _
    $region39: #{tpu_custom_call.1} parent=1 // pred_check_branch
      %251 = sbr.rel (0) target = $region41
    $region40: #{tpu_custom_call.1} parent=1 // pred_region
      %252 = dma.done [#allocation4], 128
    $region41: #{tpu_custom_call.1} parent=1 // pred_fallthru
      _
    %253 = vsyncpa [#allocation3], 1
    %254 = vsyncpa [#allocation6], 1
    %255 = vsyncpa [#allocation4], 1

</llo_original>
